<compile_context>
chip_gen: v5e
topology: v5e:2x2
jax: 0.10.0
libtpu: 0.0.40
codegen_flags: <defaults>
</compile_context>

<pallas_src>
import jax
import jax.numpy as jnp
from jax.experimental import pallas as pl
from jax.experimental.pallas import tpu as pltpu


def _resolve_shape(shape, numel):
    """Resolve a single -1 entry like torch.Tensor.view does."""
    shape = list(shape)
    if -1 in shape:
        idx = shape.index(-1)
        known = 1
        for i, s in enumerate(shape):
            if i != idx:
                known *= s
        assert known > 0 and numel % known == 0, "view shape incompatible"
        shape[idx] = numel // known
    total = 1
    for s in shape:
        total *= s
    assert total == numel, "view shape incompatible with number of elements"
    return tuple(shape)


def view_pallas(x, shape):
    """Pallas implementation of View(shape).forward(x)."""
    out_shape = _resolve_shape(shape, x.size)

    # DMA source keeps the original (contiguous, row-major) layout; a 0-d
    # input is promoted to 1-d so the copy has at least one axis.
    src = x if x.ndim >= 1 else jnp.reshape(x, (1,))

    itemsize = jnp.dtype(src.dtype).itemsize
    total_bytes = src.size * itemsize
    lead = src.shape[0]

    # A handful of large in-flight DMAs for big tensors; a single DMA otherwise.
    nchunks = 1
    if total_bytes >= (8 << 20):
        for cand in (4, 3, 2):
            if lead % cand == 0:
                nchunks = cand
                break
    chunk = lead // nchunks

    def _dma_copy_kernel(x_ref, o_ref, sems):
        if nchunks == 1:
            cp = pltpu.make_async_copy(x_ref, o_ref, sems.at[0])
            cp.start()
            cp.wait()
        else:
            copies = []
            for c in range(nchunks):  # static Python loop -> static slices
                sl = pl.ds(c * chunk, chunk)
                cp = pltpu.make_async_copy(x_ref.at[sl], o_ref.at[sl], sems.at[c])
                cp.start()
                copies.append(cp)
            for cp in copies:
                cp.wait()

    copied = pl.pallas_call(
        _dma_copy_kernel,
        out_shape=jax.ShapeDtypeStruct(src.shape, src.dtype),
        in_specs=[pl.BlockSpec(memory_space=pl.ANY)],   # raw HBM ref, no auto-DMA
        out_specs=pl.BlockSpec(memory_space=pl.ANY),    # write straight to HBM
        scratch_shapes=[pltpu.SemaphoreType.DMA((nchunks,))],
        # Pure-bandwidth op: read + write numel elements, zero flops.
        cost_estimate=pl.CostEstimate(
            flops=0,
            transcendentals=0,
            bytes_accessed=2 * total_bytes,
        ),
    )(src)

    # Row-major reshape to the target view shape is metadata-only in JAX.
    return jnp.reshape(copied, out_shape)


if __name__ == "__main__":
    key = jax.random.PRNGKey(0)

    # 1) Canonical VAE-Mario usage: flatten a conv feature map before the FC.
    N, C, H, W = 2, 4, 16, 16
    x = jax.random.normal(key, (N, C, H, W), dtype=jnp.float32)
    out = jax.block_until_ready(view_pallas(x, (-1, C * H * W)))
    ref = jnp.reshape(x, (N, C * H * W))
    assert out.shape == (N, C * H * W) and out.dtype == x.dtype
    assert bool(jnp.all(out == ref)), "view output mismatch (small)"

    # 2) Larger tensor (8 MiB) to exercise the multi-DMA path.
    k2 = jax.random.PRNGKey(1)
    xb = jax.random.normal(k2, (8, 512, 512), dtype=jnp.float32)
    outb = jax.block_until_ready(view_pallas(xb, (-1, 512 * 512)))
    assert outb.shape == (8, 512 * 512)
    assert bool(jnp.all(outb == jnp.reshape(xb, (8, 512 * 512)))), "view mismatch (large)"

    # 3) Odd element count + narrow dtype: no lane/sublane constraint for a DMA.
    k3 = jax.random.PRNGKey(2)
    xo = jax.random.normal(k3, (3, 5, 7), dtype=jnp.bfloat16)
    outo = jax.block_until_ready(view_pallas(xo, (-1,)))
    assert outo.shape == (105,) and outo.dtype == xo.dtype
    assert bool(jnp.all(outo == jnp.reshape(xo, (105,)))), "view mismatch (odd/bf16)"

    print("KERNEL_OK")
</pallas_src>

<mosaic_0001>
module attributes {stable_mosaic.version = 11 : i64} {
  func.func @_dma_copy_kernel(%arg0: memref<2x4x16x16xf32, #tpu.memory_space<any>>, %arg1: memref<2x4x16x16xf32, #tpu.memory_space<any>>, %arg2: memref<1x!tpu.dma_semaphore, #tpu.memory_space<semaphore_mem>>) attributes {dimension_semantics = [], scalar_prefetch = 0 : i64, scratch_operands = 1 : i64, tpu.core_type = #tpu.core_type<tc>} {
    %c0_i32 = arith.constant 0 : i32
    %0 = tpu.memref_slice %arg2[%c0_i32] : memref<1x!tpu.dma_semaphore, #tpu.memory_space<semaphore_mem>> -> memref<1x!tpu.dma_semaphore, #tpu.memory_space<semaphore_mem>>
    %1 = tpu.memref_squeeze %0 : memref<1x!tpu.dma_semaphore, #tpu.memory_space<semaphore_mem>> -> memref<!tpu.dma_semaphore, #tpu.memory_space<semaphore_mem>>
    tpu.enqueue_dma source(%arg0 : memref<2x4x16x16xf32, #tpu.memory_space<any>>) target(%arg1 : memref<2x4x16x16xf32, #tpu.memory_space<any>>) target_semaphore(%1 : memref<!tpu.dma_semaphore, #tpu.memory_space<semaphore_mem>>)
    %c0_i32_0 = arith.constant 0 : i32
    %2 = tpu.memref_slice %arg2[%c0_i32_0] : memref<1x!tpu.dma_semaphore, #tpu.memory_space<semaphore_mem>> -> memref<1x!tpu.dma_semaphore, #tpu.memory_space<semaphore_mem>>
    %3 = tpu.memref_squeeze %2 : memref<1x!tpu.dma_semaphore, #tpu.memory_space<semaphore_mem>> -> memref<!tpu.dma_semaphore, #tpu.memory_space<semaphore_mem>>
    tpu.wait_dma2 semaphore(%3 : memref<!tpu.dma_semaphore, #tpu.memory_space<semaphore_mem>>) src(%arg0 : memref<2x4x16x16xf32, #tpu.memory_space<any>>) dst(%arg1 : memref<2x4x16x16xf32, #tpu.memory_space<any>>)
    return
  }
}

</mosaic_0001>

<llo_original>
// kernel: tpu_custom_call.1
$region0: #{tpu_custom_call.1}
  #allocation0 [shape = 'u32[]', space=smem, size = 0x4, offset = 0x4, fixed_abs, tag = 'smem constant byte address 0x4 - core index']
  #allocation1 [shape = 'u32[72,128]{1,0:T(1,128)}', space=vmem, size = 0x9000, scoped, tag = 'internal scratch']
  #allocation2 [shape = 's32[1]{0}', space=sflag, size = 0x4, scoped, tag = 'scratch operand']
  #allocation3 [shape = 's32[]', space=sflag, size = 0x4, offset = 0, fixed_abs, tag = 'sflag constant byte address 0x0 - dummy sync flag']
  #allocation4 [shape = 'u32[0]{0}', space=smem, size = 0, offset = 0, fixed_abs, tag = 'smem constant byte address 0x0 - null']
  %s0 = inlined_call_operand.hbm [shape: f32[2,4,16,16], index: 0, kind: input, shape index: {}]
  %s1 = inlined_call_operand.hbm [shape: f32[2,4,16,16], index: 1, kind: output, shape index: {}]
  %s2 = sld [smem:[#allocation0]]
  $region2: #{tpu_custom_call.1} parent=0
    _
  %s4 = ssub.s32 1, %s2
  %s5 = scalar_select 0, %s4, %s2
  %s7 = sshll.u32 1, 14
  %s8 = sxor.u32 4294967295, %s7
  %s10 = sshll.u32 %s0, 4
  %s11 = int_to_ptr.hbm [resolvable:$true] %s10
  %s12 = sshll.u32 %s1, 4
  %s13 = int_to_ptr.hbm [resolvable:$true] %s12
  %16 = dma.general %s11, 2048, %s13, [#allocation2], [#allocation3], [#allocation4], 0, 0
  %s17 = smul.u32 2, 4
  %s18 = smul.u32 %s17, 16
  %s19 = smul.u32 %s18, 1
  %s20 = sshll.u32 %s19, 4
  %21 = dma.done [#allocation2], %s20
  %22 = vsyncmov [#allocation2]
  %s23 = vpop.sfrf %22
  %p24 = scmp.eq.s32.totalorder %s23, 0
  %p25 = pneg %p24
  %27 = shalt.err (%p25)

</llo_original>
